<compile_context>
chip_gen: v5e
topology: v5e:2x2
jax: 0.10.0
libtpu: 0.0.40
codegen_flags: <defaults>
</compile_context>

<pallas_src>
import numpy as np
import jax
import jax.numpy as jnp
from jax.experimental import pallas as pl
from jax.experimental.pallas import tpu as pltpu


def _round_up(x: int, m: int) -> int:
    return ((x + m - 1) // m) * m


# ---------------------------------------------------------------------------
# Tiny dense helpers (pure-JAX glue: adaptive avg-pool and bilinear upsample
# expressed as per-axis linear maps; these operate on <= 6x6 grids).
# ---------------------------------------------------------------------------
def _adaptive_pool_matrix(in_size: int, out_size: int) -> jnp.ndarray:
    """P @ x averages each adaptive-avg-pool bin (PyTorch AdaptiveAvgPool2d)."""
    P = np.zeros((out_size, in_size), dtype=np.float32)
    for i in range(out_size):
        start = (i * in_size) // out_size
        end = -((-(i + 1) * in_size) // out_size)  # ceil((i+1)*in/out)
        P[i, start:end] = 1.0 / (end - start)
    return jnp.asarray(P)


def _bilinear_upsample_matrix(out_size: int, in_size: int) -> jnp.ndarray:
    """U @ x: 1-D bilinear interpolation matching
    F.interpolate(mode='bilinear', align_corners=False)."""
    U = np.zeros((out_size, in_size), dtype=np.float32)
    scale = in_size / out_size
    for o in range(out_size):
        src = (o + 0.5) * scale - 0.5
        src = max(src, 0.0)
        i0 = min(int(np.floor(src)), in_size - 1)
        i1 = min(i0 + 1, in_size - 1)
        lam = src - i0
        U[o, i0] += 1.0 - lam
        U[o, i1] += lam
    return jnp.asarray(U)


# ---------------------------------------------------------------------------
# Pallas kernels: bottleneck 1x1 conv (as tiled matmul) + bias + ReLU
# ---------------------------------------------------------------------------
def _streamed_kernel(x_ref, w_ref, b_ref, o_ref, acc_ref):
    # x_ref (tm,tk) bf16, w_ref (tk,tn) bf16, b_ref (1,tn) f32,
    # o_ref (tm,tn) out dtype, acc_ref (tm,tn) f32 scratch.
    k = pl.program_id(2)

    @pl.when(k == 0)
    def _():
        acc_ref[...] = jnp.zeros_like(acc_ref)

    acc_ref[...] += jnp.dot(x_ref[...], w_ref[...],
                            preferred_element_type=jnp.float32)

    @pl.when(k == pl.num_programs(2) - 1)
    def _():
        o_ref[...] = jnp.maximum(acc_ref[...] + b_ref[...],
                                 0.0).astype(o_ref.dtype)


def _make_resident_kernel(tk: int, tn: int):
    """Kernel variant where w_ref is the FULL (Kp, Cnp) weight, resident in
    VMEM (single copy, never re-streamed from HBM); slices (tk, tn) tiles."""
    def kernel(x_ref, w_ref, b_ref, o_ref, acc_ref):
        j = pl.program_id(1)
        k = pl.program_id(2)

        @pl.when(k == 0)
        def _():
            acc_ref[...] = jnp.zeros_like(acc_ref)

        kk = pl.multiple_of(k * tk, 128)
        jj = pl.multiple_of(j * tn, 128)
        acc_ref[...] += jnp.dot(x_ref[...],
                                w_ref[pl.ds(kk, tk), pl.ds(jj, tn)],
                                preferred_element_type=jnp.float32)

        @pl.when(k == pl.num_programs(2) - 1)
        def _():
            o_ref[...] = jnp.maximum(acc_ref[...] + b_ref[...],
                                     0.0).astype(o_ref.dtype)
    return kernel


def _pick_tiles(M: int, Kp: int, Cout: int):
    """Generation-tuned tile sizes for the bottleneck matmul."""
    kind = ""
    try:
        kind = jax.devices()[0].device_kind.lower()
    except Exception:
        pass
    if "v6" in kind:
        # v6e: widest compute/BW gap (918 TF/s vs ~1.35 TB/s), 128 MiB VMEM.
        tm, tn = 2048, 1024
    else:
        # v5e / v7x knee (~240 / ~310 flops/byte); keeps footprint well inside
        # v7x's 64 MiB VMEM.
        tm, tn = 1024, 512
    tn = min(tn, _round_up(Cout, 128))
    tm = min(tm, _round_up(M, 8))
    # Keep >=2 blocks across the parallel grid axes so both v7x TensorCores
    # get work (grid=(1,1,k) would idle one TC).
    if pl.cdiv(M, tm) * pl.cdiv(Cout, tn) < 2 and M > 8:
        tm = max(8, _round_up(pl.cdiv(M, 2), 8))
    # Contraction tile: largest 128-multiple <= 512 that divides Kp (Kp is a
    # 128-multiple, so 128 always qualifies) -> no extra K padding beyond 128.
    tk = 128
    d = 256
    while d <= min(512, Kp):
        if Kp % d == 0:
            tk = d
        d += 128
    return tm, tn, tk


def bottleneck_conv1x1_relu(x2d, w_t, b, *, weight_resident=None,
                            out_dtype=jnp.bfloat16):
    """relu(x2d @ w_t + b).

    x2d: (M, Kp) pixels x channels, Kp % 128 == 0, K already zero-padded.
    w_t: (Kp, Cout) pre-transposed weight (K zero-padded to match).
    b:   (Cout,) bias.  Returns (M, Cout) in out_dtype (fp32 accumulation).
    """
    M, Kp = x2d.shape
    Kw, Cout = w_t.shape
    if Kw != Kp or Kp % 128 != 0:
        raise ValueError("contraction dims must match and be 128-aligned")

    x2d = x2d.astype(jnp.bfloat16)          # no-op if already bf16
    w_t = w_t.astype(jnp.bfloat16)
    b2 = b.astype(jnp.float32).reshape(1, Cout)

    tm, tn, tk = _pick_tiles(M, Kp, Cout)
    out_bytes = np.dtype(out_dtype).itemsize
    Cnp = _round_up(Cout, tn)

    # VMEM footprint: double-buffered x/out/bias blocks + fp32 accumulator,
    # plus either a double-buffered (tk,tn) weight block (streamed) or one
    # resident copy of the full weight.
    common = 2 * tm * tk * 2 + 2 * tn * 4 + 2 * tm * tn * out_bytes + tm * tn * 4
    stream_need = common + 2 * tk * tn * 2
    resident_need = common + Kp * Cnp * 2
    if weight_resident is None:
        weight_resident = resident_need <= (44 << 20)

    cost = pl.CostEstimate(
        flops=2 * M * Kp * Cout,
        transcendentals=0,
        bytes_accessed=M * Kp * 2 + Kp * Cout * 2 + Cout * 4 + M * Cout * out_bytes,
    )

    if weight_resident:
        # Pad Cout to a multiple of tn with zero columns / zero bias so the
        # in-kernel (tk, tn) weight slices never go out of bounds.
        if Cnp != Cout:
            w_t = jnp.pad(w_t, ((0, 0), (0, Cnp - Cout)))
            b2 = jnp.pad(b2, ((0, 0), (0, Cnp - Cout)))
        grid = (pl.cdiv(M, tm), Cnp // tn, Kp // tk)
        kernel = _make_resident_kernel(tk, tn)
        in_specs = [
            pl.BlockSpec((tm, tk), lambda i, j, k: (i, k)),        # pixel tile
            pl.BlockSpec(memory_space=pltpu.MemorySpace.VMEM),     # full weight, VMEM-resident
            pl.BlockSpec((1, tn), lambda i, j, k: (0, j)),         # bias tile
        ]
        out_cols = Cnp
        need = resident_need
    else:
        grid = (pl.cdiv(M, tm), pl.cdiv(Cout, tn), Kp // tk)
        kernel = _streamed_kernel
        in_specs = [
            pl.BlockSpec((tm, tk), lambda i, j, k: (i, k)),
            pl.BlockSpec((tk, tn), lambda i, j, k: (k, j)),
            pl.BlockSpec((1, tn), lambda i, j, k: (0, j)),
        ]
        out_cols = Cout
        need = stream_need

    vmem_limit = int(min(max(need + (8 << 20), 32 << 20), 100 << 20))

    out = pl.pallas_call(
        kernel,
        out_shape=jax.ShapeDtypeStruct((M, out_cols), out_dtype),
        grid_spec=pltpu.PrefetchScalarGridSpec(
            num_scalar_prefetch=0,
            grid=grid,
            in_specs=in_specs,
            out_specs=pl.BlockSpec((tm, tn), lambda i, j, k: (i, j)),
            scratch_shapes=[pltpu.VMEM((tm, tn), jnp.float32)],
        ),
        compiler_params=pltpu.CompilerParams(
            dimension_semantics=("parallel", "parallel", "arbitrary"),
            vmem_limit_bytes=vmem_limit,
        ),
        cost_estimate=cost,
    )(x2d, w_t, b2)

    if out_cols != Cout:
        out = out[:, :Cout]
    return out


# ---------------------------------------------------------------------------
# Parameter preparation (done once, outside the per-call forward)
# ---------------------------------------------------------------------------
def prepare_psp_params(stage_w, bottleneck_w, bottleneck_b):
    """Convert PyTorch-layout params to kernel-ready layout: the bottleneck
    weight is transposed to (Cin, Cout), cast to bf16 and zero-padded along
    the contraction dim to a multiple of 128 — once, not per forward call."""
    wb = jnp.asarray(bottleneck_w, jnp.float32)            # (Cout, Cin), PyTorch layout
    cin = wb.shape[1]
    kp = _round_up(cin, 128)
    w_t = wb.T.astype(jnp.bfloat16)                        # (Cin, Cout)
    if kp != cin:
        w_t = jnp.pad(w_t, ((0, kp - cin), (0, 0)))
    return {
        'stage_w': [jnp.asarray(w, jnp.float32) for w in stage_w],
        'bottleneck_w_t': w_t,                             # (Kp, Cout) bf16
        'bottleneck_b': jnp.asarray(bottleneck_b, jnp.float32),
        'cin': cin,
    }


# ---------------------------------------------------------------------------
# PSPModule forward
# ---------------------------------------------------------------------------
def psp_forward(feats, params, sizes=(1, 2, 3, 6), *, weight_resident=None,
                out_dtype=jnp.bfloat16):
    """feats: (N, C, H, W) fp32 NCHW (like the PyTorch module).
    Returns (N, out_features, H, W) NCHW in out_dtype (bf16 by default)."""
    N, C, H, W = feats.shape
    cin = params['cin']
    if cin != C * (len(sizes) + 1):
        raise ValueError("bottleneck weight does not match feats channels / sizes")

    # Channels-last internally: transpose only the raw input, never the
    # (len(sizes)+1)x larger concatenated tensor.
    feats_nhwc = jnp.transpose(feats, (0, 2, 3, 1))          # (N, H, W, C)

    priors = []
    for idx, s in enumerate(sizes):
        # AdaptiveAvgPool2d((s, s)) as separable per-axis averaging matrices.
        Ph = _adaptive_pool_matrix(H, s)
        Pw = _adaptive_pool_matrix(W, s)
        pooled = jnp.einsum('ih,jw,nhwc->nijc', Ph, Pw, feats_nhwc)
        # 1x1 conv, no bias (channel mixing on the tiny pooled grid).
        conv = jnp.einsum('oc,nijc->nijo', params['stage_w'][idx], pooled)
        # Bilinear upsample back to (H, W), align_corners=False.
        Uh = _bilinear_upsample_matrix(H, s)
        Uw = _bilinear_upsample_matrix(W, s)
        up = jnp.einsum('hi,wj,nijo->nhwo', Uh, Uw, conv)    # (N, H, W, C)
        priors.append(up.astype(jnp.bfloat16))               # bf16 BEFORE concat
    priors.append(feats_nhwc.astype(jnp.bfloat16))

    # Fold the contraction-dim zero-pad into the concat: a single bf16 HBM
    # write of the big activation, already 128-aligned for the kernel.
    Kp = params['bottleneck_w_t'].shape[0]
    if Kp != cin:
        priors.append(jnp.zeros((N, H, W, Kp - cin), jnp.bfloat16))
    cat = jnp.concatenate(priors, axis=-1)                   # (N, H, W, Kp)
    x2d = cat.reshape(N * H * W, Kp)                         # free reshape (no transpose)

    out2d = bottleneck_conv1x1_relu(x2d, params['bottleneck_w_t'],
                                    params['bottleneck_b'],
                                    weight_resident=weight_resident,
                                    out_dtype=out_dtype)
    Cout = params['bottleneck_w_t'].shape[1]
    # NCHW to match the PyTorch interface (done on bf16: half the bytes).
    # TODO(synk): if downstream consumes NHWC, return out2d.reshape(N,H,W,Cout)
    # directly and skip this transpose entirely.
    return out2d.reshape(N, H, W, Cout).transpose(0, 3, 1, 2)


# ---------------------------------------------------------------------------
# Pure-JAX fp32 reference (same math, no Pallas, no bf16) for validation
# ---------------------------------------------------------------------------
def psp_reference(feats, stage_w, bottleneck_w, bottleneck_b, sizes):
    N, C, H, W = feats.shape
    x = jnp.transpose(feats, (0, 2, 3, 1))
    priors = []
    for idx, s in enumerate(sizes):
        Ph = _adaptive_pool_matrix(H, s)
        Pw = _adaptive_pool_matrix(W, s)
        pooled = jnp.einsum('ih,jw,nhwc->nijc', Ph, Pw, x)
        conv = jnp.einsum('oc,nijc->nijo', stage_w[idx], pooled)
        Uh = _bilinear_upsample_matrix(H, s)
        Uw = _bilinear_upsample_matrix(W, s)
        priors.append(jnp.einsum('hi,wj,nijo->nhwo', Uh, Uw, conv))
    priors.append(x)
    cat = jnp.concatenate(priors, axis=-1)
    out = jnp.maximum(jnp.einsum('nhwc,oc->nhwo', cat, bottleneck_w)
                      + bottleneck_b, 0.0)
    return jnp.transpose(out, (0, 3, 1, 2))


if __name__ == "__main__":
    key = jax.random.PRNGKey(0)
    N, C, H, W = 2, 4, 16, 16
    sizes = (1, 2, 3, 6)
    out_features = 128  # small analogue of the default 1024

    k_stage, k_wb, k_bb, k_x = jax.random.split(key, 4)
    stage_keys = jax.random.split(k_stage, len(sizes))
    stage_w = [0.1 * jax.random.normal(sk, (C, C), jnp.float32)
               for sk in stage_keys]
    bottleneck_w = 0.1 * jax.random.normal(
        k_wb, (out_features, C * (len(sizes) + 1)), jnp.float32)
    bottleneck_b = 0.1 * jax.random.normal(k_bb, (out_features,), jnp.float32)
    feats = jax.random.normal(k_x, (N, C, H, W), jnp.float32)

    params = prepare_psp_params(stage_w, bottleneck_w, bottleneck_b)
    ref = psp_reference(feats, stage_w, bottleneck_w, bottleneck_b, sizes)
    jax.block_until_ready(ref)

    # Exercise both the VMEM-resident-weight path (auto for this size) and the
    # streamed-weight fallback, and check both against the fp32 reference.
    for resident in (None, False):
        out = psp_forward(feats, params, sizes, weight_resident=resident)
        jax.block_until_ready(out)
        assert out.shape == (N, out_features, H, W)
        assert bool(jnp.all(jnp.isfinite(out.astype(jnp.float32))))
        err = float(jnp.max(jnp.abs(out.astype(jnp.float32) - ref)))
        assert err < 5e-2, f"max abs err {err} (resident={resident})"

    print("KERNEL_OK")
</pallas_src>

<mosaic_0001>
module attributes {stable_mosaic.version = 11 : i64} {
  func.func @kernel(%arg0: i32, %arg1: i32, %arg2: i32, %arg3: memref<256x128xbf16, #tpu.memory_space<vmem>>, %arg4: memref<128x128xbf16, #tpu.memory_space<vmem>>, %arg5: memref<1x128xf32, #tpu.memory_space<vmem>>, %arg6: memref<256x128xbf16, #tpu.memory_space<vmem>>, %arg7: memref<256x128xf32, #tpu.memory_space<vmem>>) attributes {dimension_semantics = [#tpu.dimension_semantics<parallel>, #tpu.dimension_semantics<parallel>, #tpu.dimension_semantics<arbitrary>], iteration_bounds = array<i64: 2, 1, 1>, scalar_prefetch = 0 : i64, scratch_operands = 1 : i64, tpu.core_type = #tpu.core_type<tc>, window_params = [{transform_indices = @transform_0, window_bounds = array<i64: 256, 128>}, {pipeline_mode = #tpu.pipeline_mode<synchronous>, transform_indices = @transform_1, window_bounds = array<i64: 128, 128>}, {transform_indices = @transform_2, window_bounds = array<i64: 1, 128>}, {transform_indices = @transform_3, window_bounds = array<i64: 256, 128>}]} {
    %c0_i32 = arith.constant 0 : i32
    %0 = arith.cmpi eq, %arg2, %c0_i32 : i32
    %1 = arith.extui %0 : i1 to i32
    %c0_i32_0 = arith.constant 0 : i32
    %2 = arith.cmpi ne, %1, %c0_i32_0 : i32
    scf.if %2 {
      %cst_9 = arith.constant 0.000000e+00 : f32
      %18 = vector.broadcast %cst_9 : f32 to vector<256x128xf32>
      %c0_10 = arith.constant 0 : index
      %c0_11 = arith.constant 0 : index
      %19 = vector.load %arg7[%c0_10, %c0_11] : memref<256x128xf32, #tpu.memory_space<vmem>>, vector<256x128xf32>
      tpu.vector_store %arg7[%c0_10, %c0_11], %18 {strides = array<i32>} : memref<256x128xf32, #tpu.memory_space<vmem>>, vector<256x128xf32>,
    } else {
    }
    %c128_i32 = arith.constant 128 : i32
    %3 = arith.muli %arg2, %c128_i32 : i32
    %4 = tpu.assume_multiple %3, 128 : i32
    %c128_i32_1 = arith.constant 128 : i32
    %5 = arith.muli %arg1, %c128_i32_1 : i32
    %6 = tpu.assume_multiple %5, 128 : i32
    %c0 = arith.constant 0 : index
    %c0_2 = arith.constant 0 : index
    %7 = vector.load %arg7[%c0, %c0_2] : memref<256x128xf32, #tpu.memory_space<vmem>>, vector<256x128xf32>
    %c0_3 = arith.constant 0 : index
    %c0_4 = arith.constant 0 : index
    %8 = vector.load %arg3[%c0_3, %c0_4] : memref<256x128xbf16, #tpu.memory_space<vmem>>, vector<256x128xbf16>
    %9 = arith.index_cast %4 : i32 to index
    %10 = arith.index_cast %6 : i32 to index
    %11 = vector.load %arg4[%9, %10] : memref<128x128xbf16, #tpu.memory_space<vmem>>, vector<128x128xbf16>
    %cst = arith.constant dense<0.000000e+00> : vector<256x128xf32>
    %12 = tpu.matmul %8, %11, %cst {dimension_numbers = #tpu.dot_dimension_numbers<[1], [0], [0], [1], [0, 0, 1, 1], [], []>} : vector<256x128xbf16>, vector<128x128xbf16>, vector<256x128xf32> -> vector<256x128xf32>
    %13 = arith.addf %7, %12 : vector<256x128xf32>
    %c0_5 = arith.constant 0 : index
    %c0_6 = arith.constant 0 : index
    %14 = vector.load %arg7[%c0_5, %c0_6] : memref<256x128xf32, #tpu.memory_space<vmem>>, vector<256x128xf32>
    tpu.vector_store %arg7[%c0_5, %c0_6], %13 {strides = array<i32>} : memref<256x128xf32, #tpu.memory_space<vmem>>, vector<256x128xf32>,
    %c0_i32_7 = arith.constant 0 : i32
    %15 = arith.cmpi eq, %arg2, %c0_i32_7 : i32
    %16 = arith.extui %15 : i1 to i32
    %c0_i32_8 = arith.constant 0 : i32
    %17 = arith.cmpi ne, %16, %c0_i32_8 : i32
    scf.if %17 {
      %c0_9 = arith.constant 0 : index
      %c0_10 = arith.constant 0 : index
      %18 = vector.load %arg7[%c0_9, %c0_10] : memref<256x128xf32, #tpu.memory_space<vmem>>, vector<256x128xf32>
      %c0_11 = arith.constant 0 : index
      %c0_12 = arith.constant 0 : index
      %19 = vector.load %arg5[%c0_11, %c0_12] : memref<1x128xf32, #tpu.memory_space<vmem>>, vector<1x128xf32>
      %20 = vector.broadcast %19 : vector<1x128xf32> to vector<256x128xf32>
      %21 = arith.addf %18, %20 : vector<256x128xf32>
      %cst_13 = arith.constant 0.000000e+00 : f32
      %22 = vector.broadcast %cst_13 : f32 to vector<256x128xf32>
      %23 = arith.maximumf %21, %22 : vector<256x128xf32>
      %24 = arith.truncf %23 : vector<256x128xf32> to vector<256x128xbf16>
      %c0_14 = arith.constant 0 : index
      %c0_15 = arith.constant 0 : index
      %25 = vector.load %arg6[%c0_14, %c0_15] : memref<256x128xbf16, #tpu.memory_space<vmem>>, vector<256x128xbf16>
      tpu.vector_store %arg6[%c0_14, %c0_15], %24 {strides = array<i32>} : memref<256x128xbf16, #tpu.memory_space<vmem>>, vector<256x128xbf16>,
    } else {
    }
    return
  }
  func.func @transform_0(%arg0: i32, %arg1: i32, %arg2: i32) -> (i32, i32) {
    %c0_i32 = arith.constant 0 : i32
    return %arg0, %arg2 : i32, i32
  }
  func.func @transform_1(%arg0: i32, %arg1: i32, %arg2: i32) -> (i32, i32) {
    %c0_i32 = arith.constant 0 : i32
    %c0_i32_0 = arith.constant 0 : i32
    %c0_i32_1 = arith.constant 0 : i32
    return %c0_i32, %c0_i32_0 : i32, i32
  }
  func.func @transform_2(%arg0: i32, %arg1: i32, %arg2: i32) -> (i32, i32) {
    %c0_i32 = arith.constant 0 : i32
    %c0_i32_0 = arith.constant 0 : i32
    return %c0_i32, %arg1 : i32, i32
  }
  func.func @transform_3(%arg0: i32, %arg1: i32, %arg2: i32) -> (i32, i32) {
    %c0_i32 = arith.constant 0 : i32
    return %arg0, %arg1 : i32, i32
  }
}

</mosaic_0001>

<llo_original>
// kernel: tpu_custom_call.1
$region0: #{tpu_custom_call.1}
  #allocation0 [shape = 'u32[]', space=smem, size = 0x4, offset = 0x4, fixed_abs, tag = 'smem constant byte address 0x4 - core index']
  #allocation1 [shape = 'u32[72,128]{1,0:T(1,128)}', space=vmem, size = 0x9000, scoped, tag = 'internal scratch']
  #allocation2 [shape = 'f32[256,128]{1,0:T(8,128)}', space=vmem, size = 0x20000, scoped, tag = 'scratch operand']
  %s0 = inlined_call_operand.hbm [shape: bf16[512,128], index: 0, kind: input, shape index: {}]
  %s1 = inlined_call_operand.hbm [shape: bf16[128,128], index: 1, kind: input, shape index: {}]
  %s2 = inlined_call_operand.vmem [shape: f32[1,128], index: 2, kind: input, shape index: {}]
  %s3 = inlined_call_operand.hbm [shape: bf16[512,128], index: 3, kind: output, shape index: {}]
  %s4 = sld [smem:[#allocation0]]
  $region61: #{tpu_custom_call.1} parent=0
    _
  %s6 = ssub.s32 1, %s4
  %s7 = scalar_select 0, %s6, %s4
  $region1: #{tpu_custom_call.1} parent=0
    #allocation3 [shape = 'u8[131072]{0}', space=vmem, size = 0x20000, scoped, tag = 'input window, operand 0']
    #allocation4 [shape = 's32[2]{0}', space=sflag, size = 0x8, scoped, tag = 'scoped memory for tpu_custom_call.1']
    #allocation5 [shape = 's32[2]{0}', space=sflag, size = 0x8, scoped, tag = 'scoped memory for tpu_custom_call.1']
    #allocation6 [shape = 'u8[32768]{0}', space=vmem, size = 0x8000, scoped, tag = 'input window, operand 1, single buffered']
    #allocation7 [shape = 's32[1]{0}', space=sflag, size = 0x4, scoped, tag = 'scoped memory for tpu_custom_call.1']
    #allocation8 [shape = 'u8[131072]{0}', space=vmem, size = 0x20000, scoped, tag = 'output window, operand 0']
    %8 = vsyncpa [#allocation4], 0
    %s9 = scalar_lea.sflag [#allocation4], 1
    %10 = vsyncpa %s9, 0
    %11 = vsyncpa [#allocation7], 0
    %12 = vsyncpa [#allocation5], 0
    %s13 = scalar_lea.sflag [#allocation5], 1
    %14 = vsyncpa %s13, 0
    loop: start=0, step=1, limit=4
    $region2: #{tpu_custom_call.1} parent=1 // loop_pre_header
      _
    $region3: #{tpu_custom_call.1} parent=1 // loop_header
      %s16 = sphi 0, %s20
      %p17 = scmp.ge.s32.totalorder %s16, 4
      %s23 = sphi 0, %s42
      %s24 = sphi 0, %s38
      %s25 = sphi 0, %s34
      %s26 = sphi 0, %s23
      %s27 = sphi 0, %s24
      %s28 = sphi 0, %s25
      %s29 = sphi 0, %s26
      %s30 = sphi 0, %s27
      %s31 = sphi 0, %s28
      %s47 = sphi 0, %s49
      %s50 = sphi 0, %s47
      %s51 = sphi 0, %s50
      %s67 = sphi 0, %s51
      %s71 = sphi 0, %s71
      %s73 = sphi 0, %s71
      %s74 = sphi 0, %s73
      %s88 = sphi 0, %s74
      %s94 = sphi 0, %s96
      %s97 = sphi 0, %s94
      %s98 = sphi 0, %s97
      %s114 = sphi 0, %s98
      %s122 = sphi 0, %s124
      %s125 = sphi 0, %s122
      %s126 = sphi 0, %s125
      %s142 = sphi 0, %s126
    $region4: #{tpu_custom_call.1} parent=1 // loop_header_branch
      %19 = sbr.rel (%p17) target = $region8
    $region5: #{tpu_custom_call.1} parent=1 // loop_body
      %s21 = ssub.s32 %s16, 1
      %s22 = ssub.s32 %s16, 2
      %s32 = sadd.s32 1, %s25
      %p33 = scmp.ge.s32.totalorder %s32, 1
      %s34 = scalar_select %p33, 0, %s32
      %s35 = sadd.s32 1, %s24
      %s36 = scalar_select %p33, %s35, %s24
      %p37 = scmp.ge.s32.totalorder %s36, 1
      %s38 = scalar_select %p37, 0, %s36
      %s39 = sadd.s32 1, %s23
      %s40 = scalar_select %p37, %s39, %s23
      %p41 = scmp.ge.s32.totalorder %s40, 2
      %s42 = scalar_select %p41, 0, %s40
      %s43 = ssub.s32 %s23, %s42
      %s44 = ssub.s32 %s25, %s34
      %s45 = sor.u32 %s43, %s44
      %p46 = scmp.eq.s32.totalorder %s45, 0
      %s48 = sadd.s32 %s47, 1
      %s49 = scalar_select %p46, %s47, %s48
      %p52 = pneg %p46
      %p53 = scmp.eq.s32.totalorder %s16, 1
      %p54 = por %p52, %p53
      %p55 = scmp.ne.s32.totalorder %s47, %s50
      %p56 = scmp.eq.s32.totalorder %s16, 0
      %p57 = por %p55, %p56
      %p58 = scmp.ne.s32.totalorder %s47, %s50
      %p59 = scmp.eq.s32.totalorder %s21, 1
      %p60 = por %p58, %p59
      %p61 = scmp.ne.s32.totalorder %s50, %s51
      %p62 = scmp.eq.s32.totalorder %s21, 0
      %p63 = por %p61, %p62
      %p64 = scmp.ne.s32.totalorder %s50, %s51
      %p65 = scmp.eq.s32.totalorder %s22, 1
      %p66 = por %p64, %p65
      %p68 = scmp.ne.s32.totalorder %s51, %s67
      %p69 = scmp.eq.s32.totalorder %s22, 0
      %p70 = por %p68, %p69
      %s72 = sadd.s32 %s71, 1
      %p75 = scmp.eq.s32.totalorder %s16, 1
      %p76 = scmp.ne.s32.totalorder %s71, %s73
      %p77 = scmp.eq.s32.totalorder %s16, 0
      %p78 = por %p76, %p77
      %p79 = scmp.ne.s32.totalorder %s71, %s73
      %p80 = scmp.eq.s32.totalorder %s21, 1
      %p81 = por %p79, %p80
      %p82 = scmp.ne.s32.totalorder %s73, %s74
      %p83 = scmp.eq.s32.totalorder %s21, 0
      %p84 = por %p82, %p83
      %p85 = scmp.ne.s32.totalorder %s73, %s74
      %p86 = scmp.eq.s32.totalorder %s22, 1
      %p87 = por %p85, %p86
      %p89 = scmp.ne.s32.totalorder %s74, %s88
      %p90 = scmp.eq.s32.totalorder %s22, 0
      %p91 = por %p89, %p90
      %s92 = ssub.s32 %s24, %s38
      %p93 = scmp.eq.s32.totalorder %s92, 0
      %s95 = sadd.s32 %s94, 1
      %s96 = scalar_select %p93, %s94, %s95
      %p99 = pneg %p93
      %p100 = scmp.eq.s32.totalorder %s16, 1
      %p101 = por %p99, %p100
      %p102 = scmp.ne.s32.totalorder %s94, %s97
      %p103 = scmp.eq.s32.totalorder %s16, 0
      %p104 = por %p102, %p103
      %p105 = scmp.ne.s32.totalorder %s94, %s97
      %p106 = scmp.eq.s32.totalorder %s21, 1
      %p107 = por %p105, %p106
      %p108 = scmp.ne.s32.totalorder %s97, %s98
      %p109 = scmp.eq.s32.totalorder %s21, 0
      %p110 = por %p108, %p109
      %p111 = scmp.ne.s32.totalorder %s97, %s98
      %p112 = scmp.eq.s32.totalorder %s22, 1
      %p113 = por %p111, %p112
      %p115 = scmp.ne.s32.totalorder %s98, %s114
      %p116 = scmp.eq.s32.totalorder %s22, 0
      %p117 = por %p115, %p116
      %s118 = ssub.s32 %s23, %s42
      %s119 = ssub.s32 %s24, %s38
      %s120 = sor.u32 %s118, %s119
      %p121 = scmp.eq.s32.totalorder %s120, 0
      %s123 = sadd.s32 %s122, 1
      %s124 = scalar_select %p121, %s122, %s123
      %p127 = pneg %p121
      %p128 = scmp.eq.s32.totalorder %s16, 1
      %p129 = por %p127, %p128
      %p130 = scmp.ne.s32.totalorder %s122, %s125
      %p131 = scmp.eq.s32.totalorder %s16, 0
      %p132 = por %p130, %p131
      %p133 = scmp.ne.s32.totalorder %s122, %s125
      %p134 = scmp.eq.s32.totalorder %s21, 1
      %p135 = por %p133, %p134
      %p136 = scmp.ne.s32.totalorder %s125, %s126
      %p137 = scmp.eq.s32.totalorder %s21, 0
      %p138 = por %p136, %p137
      %p139 = scmp.ne.s32.totalorder %s125, %s126
      %p140 = scmp.eq.s32.totalorder %s22, 1
      %p141 = por %p139, %p140
      %p143 = scmp.ne.s32.totalorder %s126, %s142
      %p144 = scmp.eq.s32.totalorder %s22, 0
      %p145 = por %p143, %p144
      %p146 = scmp.le.s32.totalorder 1, %s16
      %p147 = scmp.lt.s32.totalorder %s16, 3
      %p148 = pnand %p146, %p147
      %p149 = pneg %p148
      // Predicated region
      $region9: #{tpu_custom_call.1} parent=5 // pred_check
        _
      $region10: #{tpu_custom_call.1} parent=5 // pred_check_branch
        %151 = sbr.rel (%p148) target = $region12
      $region11: #{tpu_custom_call.1} parent=5 // pred_region
        %s152 = ssub.s32 %s16, 1
        // Predicated region
        $region13: #{tpu_custom_call.1} parent=11 // pred_check
          %p153 = pneg %p84
        $region14: #{tpu_custom_call.1} parent=11 // pred_check_branch
          %155 = sbr.rel (%p153) target = $region16
        $region15: #{tpu_custom_call.1} parent=11 // pred_region
          %157 = vsyncadd [#allocation7], 0
          %s158 = sshll.u32 %s1, 4
          %s159 = int_to_ptr.hbm [resolvable:$true] %s158
          %s160 = sshll.u32 [#allocation6], 4
          %s161 = int_to_ptr.vmem [resolvable:$true] %s160
          %166 = dma.hbm_to_vmem [thread:$0]  %s159, 1024, %s161, [#allocation7], 64, 64, 4
        $region16: #{tpu_custom_call.1} parent=11 // pred_fallthru
          _
        // Predicated region
        $region17: #{tpu_custom_call.1} parent=11 // pred_check
          %p167 = pneg %p110
        $region18: #{tpu_custom_call.1} parent=11 // pred_check_branch
          %169 = sbr.rel (%p167) target = $region20
        $region19: #{tpu_custom_call.1} parent=11 // pred_region
          %p170 = scmp.lt.s32.totalorder %s27, 0
          %s171 = scalar_select %p170, %s27, 0
          %s172 = scalar_lea.vmem %s2, %s171
        $region20: #{tpu_custom_call.1} parent=11 // pred_fallthru
          _
      $region12: #{tpu_custom_call.1} parent=5 // pred_fallthru
        _
      %p173 = scmp.lt.s32.totalorder %s16, 2
      // Predicated region
      $region21: #{tpu_custom_call.1} parent=5 // pred_check
        %p174 = pneg %p173
      $region22: #{tpu_custom_call.1} parent=5 // pred_check_branch
        %176 = sbr.rel (%p174) target = $region24
      $region23: #{tpu_custom_call.1} parent=5 // pred_region
        // Predicated region
        $region25: #{tpu_custom_call.1} parent=23 // pred_check
          %p177 = pneg %p57
        $region26: #{tpu_custom_call.1} parent=23 // pred_check_branch
          %179 = sbr.rel (%p177) target = $region28
        $region27: #{tpu_custom_call.1} parent=23 // pred_region
          %s180 = sand.u32 %s47, 1
          %s181 = scalar_lea.sflag [#allocation4], %s180
          %s182 = sand.u32 %s47, 1
          %s183 = smul.addr %s182, 128
          %s184 = scalar_lea.vmem [#allocation3], %s183
          %s185 = smul.u32 32, %s23
          %187 = vsyncadd %s181, 0
          %s188 = sadd.s32 %s25, %s185
          %s189 = smul.addr %s188, 4
          %s190 = scalar_lea.hbm %s0, %s189
          %s191 = sshll.u32 %s190, 4
          %s192 = int_to_ptr.hbm [resolvable:$true] %s191
          %s193 = sshll.u32 %s184, 4
          %s194 = int_to_ptr.vmem [resolvable:$true] %s193
          %199 = dma.hbm_to_vmem [thread:$0]  %s192, 2048, %s194, %s181, 64, 64, 4
        $region28: #{tpu_custom_call.1} parent=23 // pred_fallthru
          _
      $region24: #{tpu_custom_call.1} parent=5 // pred_fallthru
        _
      %p200 = scmp.le.s32.totalorder 1, %s16
      %p201 = scmp.lt.s32.totalorder %s16, 3
      %p202 = pnand %p200, %p201
      %p203 = pneg %p202
      // Predicated region
      $region29: #{tpu_custom_call.1} parent=5 // pred_check
        _
      $region30: #{tpu_custom_call.1} parent=5 // pred_check_branch
        %205 = sbr.rel (%p202) target = $region32
      $region31: #{tpu_custom_call.1} parent=5 // pred_region
        %s206 = ssub.s32 %s16, 1
        %s207 = sand.u32 %s50, 1
        %s208 = scalar_lea.sflag [#allocation4], %s207
        %s209 = sand.u32 %s50, 1
        %s210 = smul.addr %s209, 128
        %s211 = scalar_lea.vmem [#allocation3], %s210
        // Predicated region
        $region33: #{tpu_custom_call.1} parent=31 // pred_check
          %p212 = pneg %p63
        $region34: #{tpu_custom_call.1} parent=31 // pred_check_branch
          %214 = sbr.rel (%p212) target = $region36
        $region35: #{tpu_custom_call.1} parent=31 // pred_region
          %216 = dma.done %s208, 2048
        $region36: #{tpu_custom_call.1} parent=31 // pred_fallthru
          _
        // Predicated region
        $region37: #{tpu_custom_call.1} parent=31 // pred_check
          %p217 = pneg %p84
        $region38: #{tpu_custom_call.1} parent=31 // pred_check_branch
          %219 = sbr.rel (%p217) target = $region40
        $region39: #{tpu_custom_call.1} parent=31 // pred_region
          %221 = dma.done [#allocation7], 1024
        $region40: #{tpu_custom_call.1} parent=31 // pred_fallthru
          _
        %s222 = sand.u32 %s50, 1
        %s223 = scalar_lea.sflag [#allocation4], %s222
        %s224 = sand.u32 %s50, 1
        %s225 = smul.addr %s224, 128
        %s226 = scalar_lea.vmem [#allocation3], %s225
        %p227 = pneg %p63
        %p228 = pneg %p60
        %p229 = pneg %p84
        %p230 = pneg %p81
        %p231 = scmp.lt.s32.totalorder %s27, 0
        %s232 = scalar_select %p231, %s27, 0
        %s233 = scalar_lea.vmem %s2, %s232
        %p234 = pneg %p110
        %p235 = pneg %p107
        %p236 = pneg %p138
        %p237 = pneg %p135
        %s238 = sand.u32 %s125, 1
        %s239 = scalar_lea.sflag [#allocation5], %s238
        %s240 = sand.u32 %s125, 1
        %s241 = smul.addr %s240, 128
        %s242 = scalar_lea.vmem [#allocation8], %s241
        %s243 = smul.u32 32, %s26
        %p244 = scmp.lt.s32.totalorder %s27, 0
        %s245 = scalar_select %p244, %s27, 0
        %s246 = scalar_lea.vmem %s2, %s245
        %s247 = smul.u32 32, %s26
        %p248 = scmp.eq.s32.totalorder %s28, 0
        // Predicated region
        $region41: #{tpu_custom_call.1} parent=31 // pred_check
          %p249 = pneg %p248
        $region42: #{tpu_custom_call.1} parent=31 // pred_check_branch
          %251 = sbr.rel (%p249) target = $region44
        $region43: #{tpu_custom_call.1} parent=31 // pred_region
          %252 = vst [vmem:[#allocation2] sm:$0xff] 0.0
          %253 = vst [vmem:[#allocation2 + $0x8] sm:$0xff] 0.0
          %254 = vst [vmem:[#allocation2 + $0x10] sm:$0xff] 0.0
          %255 = vst [vmem:[#allocation2 + $0x18] sm:$0xff] 0.0
          %256 = vst [vmem:[#allocation2 + $0x20] sm:$0xff] 0.0
          %257 = vst [vmem:[#allocation2 + $0x28] sm:$0xff] 0.0
          %258 = vst [vmem:[#allocation2 + $0x30] sm:$0xff] 0.0
          %259 = vst [vmem:[#allocation2 + $0x38] sm:$0xff] 0.0
          %260 = vst [vmem:[#allocation2 + $0x40] sm:$0xff] 0.0
          %261 = vst [vmem:[#allocation2 + $0x48] sm:$0xff] 0.0
          %262 = vst [vmem:[#allocation2 + $0x50] sm:$0xff] 0.0
          %263 = vst [vmem:[#allocation2 + $0x58] sm:$0xff] 0.0
          %264 = vst [vmem:[#allocation2 + $0x60] sm:$0xff] 0.0
          %265 = vst [vmem:[#allocation2 + $0x68] sm:$0xff] 0.0
          %266 = vst [vmem:[#allocation2 + $0x70] sm:$0xff] 0.0
          %267 = vst [vmem:[#allocation2 + $0x78] sm:$0xff] 0.0
          %268 = vst [vmem:[#allocation2 + $0x80] sm:$0xff] 0.0
          %269 = vst [vmem:[#allocation2 + $0x88] sm:$0xff] 0.0
          %270 = vst [vmem:[#allocation2 + $0x90] sm:$0xff] 0.0
          %271 = vst [vmem:[#allocation2 + $0x98] sm:$0xff] 0.0
          %272 = vst [vmem:[#allocation2 + $0xa0] sm:$0xff] 0.0
          %273 = vst [vmem:[#allocation2 + $0xa8] sm:$0xff] 0.0
          %274 = vst [vmem:[#allocation2 + $0xb0] sm:$0xff] 0.0
          %275 = vst [vmem:[#allocation2 + $0xb8] sm:$0xff] 0.0
          %276 = vst [vmem:[#allocation2 + $0xc0] sm:$0xff] 0.0
          %277 = vst [vmem:[#allocation2 + $0xc8] sm:$0xff] 0.0
          %278 = vst [vmem:[#allocation2 + $0xd0] sm:$0xff] 0.0
          %279 = vst [vmem:[#allocation2 + $0xd8] sm:$0xff] 0.0
          %280 = vst [vmem:[#allocation2 + $0xe0] sm:$0xff] 0.0
          %281 = vst [vmem:[#allocation2 + $0xe8] sm:$0xff] 0.0
          %282 = vst [vmem:[#allocation2 + $0xf0] sm:$0xff] 0.0
          %283 = vst [vmem:[#allocation2 + $0xf8] sm:$0xff] 0.0
        $region44: #{tpu_custom_call.1} parent=31 // pred_fallthru
          _
        %s284 = smul.u32 %s28, 128
        %s285 = smul.u32 %s27, 128
        %v286 = vld [vmem:[#allocation2] sm:$0xff]
        %v287 = vld [vmem:[#allocation2 + $0x8] sm:$0xff]
        %v288 = vld [vmem:[#allocation2 + $0x10] sm:$0xff]
        %v289 = vld [vmem:[#allocation2 + $0x18] sm:$0xff]
        %v290 = vld [vmem:[#allocation2 + $0x20] sm:$0xff]
        %v291 = vld [vmem:[#allocation2 + $0x28] sm:$0xff]
        %v292 = vld [vmem:[#allocation2 + $0x30] sm:$0xff]
        %v293 = vld [vmem:[#allocation2 + $0x38] sm:$0xff]
        %v294 = vld [vmem:[#allocation2 + $0x40] sm:$0xff]
        %v295 = vld [vmem:[#allocation2 + $0x48] sm:$0xff]
        %v296 = vld [vmem:[#allocation2 + $0x50] sm:$0xff]
        %v297 = vld [vmem:[#allocation2 + $0x58] sm:$0xff]
        %v298 = vld [vmem:[#allocation2 + $0x60] sm:$0xff]
        %v299 = vld [vmem:[#allocation2 + $0x68] sm:$0xff]
        %v300 = vld [vmem:[#allocation2 + $0x70] sm:$0xff]
        %v301 = vld [vmem:[#allocation2 + $0x78] sm:$0xff]
        %v302 = vld [vmem:[#allocation2 + $0x80] sm:$0xff]
        %v303 = vld [vmem:[#allocation2 + $0x88] sm:$0xff]
        %v304 = vld [vmem:[#allocation2 + $0x90] sm:$0xff]
        %v305 = vld [vmem:[#allocation2 + $0x98] sm:$0xff]
        %v306 = vld [vmem:[#allocation2 + $0xa0] sm:$0xff]
        %v307 = vld [vmem:[#allocation2 + $0xa8] sm:$0xff]
        %v308 = vld [vmem:[#allocation2 + $0xb0] sm:$0xff]
        %v309 = vld [vmem:[#allocation2 + $0xb8] sm:$0xff]
        %v310 = vld [vmem:[#allocation2 + $0xc0] sm:$0xff]
        %v311 = vld [vmem:[#allocation2 + $0xc8] sm:$0xff]
        %v312 = vld [vmem:[#allocation2 + $0xd0] sm:$0xff]
        %v313 = vld [vmem:[#allocation2 + $0xd8] sm:$0xff]
        %v314 = vld [vmem:[#allocation2 + $0xe0] sm:$0xff]
        %v315 = vld [vmem:[#allocation2 + $0xe8] sm:$0xff]
        %v316 = vld [vmem:[#allocation2 + $0xf0] sm:$0xff]
        %v317 = vld [vmem:[#allocation2 + $0xf8] sm:$0xff]
        %v318 = vld [vmem:[%s211] sm:$0xf]
        %v319 = vld [vmem:[%s211 + $0x4] sm:$0xf]
        %v320 = vld [vmem:[%s211 + $0x8] sm:$0xf]
        %v321 = vld [vmem:[%s211 + $0xc] sm:$0xf]
        %v322 = vld [vmem:[%s211 + $0x10] sm:$0xf]
        %v323 = vld [vmem:[%s211 + $0x14] sm:$0xf]
        %v324 = vld [vmem:[%s211 + $0x18] sm:$0xf]
        %v325 = vld [vmem:[%s211 + $0x1c] sm:$0xf]
        %v326 = vld [vmem:[%s211 + $0x20] sm:$0xf]
        %v327 = vld [vmem:[%s211 + $0x24] sm:$0xf]
        %v328 = vld [vmem:[%s211 + $0x28] sm:$0xf]
        %v329 = vld [vmem:[%s211 + $0x2c] sm:$0xf]
        %v330 = vld [vmem:[%s211 + $0x30] sm:$0xf]
        %v331 = vld [vmem:[%s211 + $0x34] sm:$0xf]
        %v332 = vld [vmem:[%s211 + $0x38] sm:$0xf]
        %v333 = vld [vmem:[%s211 + $0x3c] sm:$0xf]
        %v334 = vld [vmem:[%s211 + $0x40] sm:$0xf]
        %v335 = vld [vmem:[%s211 + $0x44] sm:$0xf]
        %v336 = vld [vmem:[%s211 + $0x48] sm:$0xf]
        %v337 = vld [vmem:[%s211 + $0x4c] sm:$0xf]
        %v338 = vld [vmem:[%s211 + $0x50] sm:$0xf]
        %v339 = vld [vmem:[%s211 + $0x54] sm:$0xf]
        %v340 = vld [vmem:[%s211 + $0x58] sm:$0xf]
        %v341 = vld [vmem:[%s211 + $0x5c] sm:$0xf]
        %v342 = vld [vmem:[%s211 + $0x60] sm:$0xf]
        %v343 = vld [vmem:[%s211 + $0x64] sm:$0xf]
        %v344 = vld [vmem:[%s211 + $0x68] sm:$0xf]
        %v345 = vld [vmem:[%s211 + $0x6c] sm:$0xf]
        %v346 = vld [vmem:[%s211 + $0x70] sm:$0xf]
        %v347 = vld [vmem:[%s211 + $0x74] sm:$0xf]
        %v348 = vld [vmem:[%s211 + $0x78] sm:$0xf]
        %v349 = vld [vmem:[%s211 + $0x7c] sm:$0xf]
        %s350 = sshra.s32 %s285, 7
        %s351 = sand.u32 %s285, 127
        %s352 = sshra.s32 %s284, 3
        %s353 = sand.u32 %s284, 7
        %s354 = sadd.s32 %s350, %s352
        %s355 = smul.addr %s354, 4
        %s356 = scalar_lea.vmem [#allocation6], %s355
        %v357 = vld [vmem:[%s356] sm:$0xf]
        %v358 = vld [vmem:[%s356 + $0x4] sm:$0xf]
        %v359 = vld [vmem:[%s356 + $0x8] sm:$0xf]
        %v360 = vld [vmem:[%s356 + $0xc] sm:$0xf]
        %v361 = vld [vmem:[%s356 + $0x10] sm:$0xf]
        %v362 = vld [vmem:[%s356 + $0x14] sm:$0xf]
        %v363 = vld [vmem:[%s356 + $0x18] sm:$0xf]
        %v364 = vld [vmem:[%s356 + $0x1c] sm:$0xf]
        %v365 = vld [vmem:[%s356 + $0x20] sm:$0xf]
        %v366 = vld [vmem:[%s356 + $0x24] sm:$0xf]
        %v367 = vld [vmem:[%s356 + $0x28] sm:$0xf]
        %v368 = vld [vmem:[%s356 + $0x2c] sm:$0xf]
        %v369 = vld [vmem:[%s356 + $0x30] sm:$0xf]
        %v370 = vld [vmem:[%s356 + $0x34] sm:$0xf]
        %v371 = vld [vmem:[%s356 + $0x38] sm:$0xf]
        %v372 = vld [vmem:[%s356 + $0x3c] sm:$0xf]
        %v405 = vunpack.c.l.b16 %v318
        %v406 = vunpack.c.l.b16 %v319
        %v407 = vunpack.c.l.b16 %v320
        %v408 = vunpack.c.l.b16 %v321
        %v409 = vunpack.c.l.b16 %v322
        %v410 = vunpack.c.l.b16 %v323
        %v411 = vunpack.c.l.b16 %v324
        %v412 = vunpack.c.l.b16 %v325
        %v413 = vunpack.c.l.b16 %v326
        %v414 = vunpack.c.l.b16 %v327
        %v415 = vunpack.c.l.b16 %v328
        %v416 = vunpack.c.l.b16 %v329
        %v417 = vunpack.c.l.b16 %v330
        %v418 = vunpack.c.l.b16 %v331
        %v419 = vunpack.c.l.b16 %v332
        %v420 = vunpack.c.l.b16 %v333
        %v421 = vunpack.c.l.b16 %v334
        %v422 = vunpack.c.l.b16 %v335
        %v423 = vunpack.c.l.b16 %v336
        %v424 = vunpack.c.l.b16 %v337
        %v425 = vunpack.c.l.b16 %v338
        %v426 = vunpack.c.l.b16 %v339
        %v427 = vunpack.c.l.b16 %v340
        %v428 = vunpack.c.l.b16 %v341
        %v429 = vunpack.c.l.b16 %v342
        %v430 = vunpack.c.l.b16 %v343
        %v431 = vunpack.c.l.b16 %v344
        %v432 = vunpack.c.l.b16 %v345
        %v433 = vunpack.c.l.b16 %v346
        %v434 = vunpack.c.l.b16 %v347
        %v435 = vunpack.c.l.b16 %v348
        %v436 = vunpack.c.l.b16 %v349
        %v437 = vpack.c.b16 %v406, %v405
        %v438 = vpack.c.b16 %v408, %v407
        %v439 = vpack.c.b16 %v410, %v409
        %v440 = vpack.c.b16 %v412, %v411
        %v441 = vpack.c.b16 %v414, %v413
        %v442 = vpack.c.b16 %v416, %v415
        %v443 = vpack.c.b16 %v418, %v417
        %v444 = vpack.c.b16 %v420, %v419
        %v445 = vpack.c.b16 %v422, %v421
        %v446 = vpack.c.b16 %v424, %v423
        %v447 = vpack.c.b16 %v426, %v425
        %v448 = vpack.c.b16 %v428, %v427
        %v449 = vpack.c.b16 %v430, %v429
        %v450 = vpack.c.b16 %v432, %v431
        %v451 = vpack.c.b16 %v434, %v433
        %v452 = vpack.c.b16 %v436, %v435
        %v485 = vunpack.c.l.b16 %v357
        %v486 = vunpack.c.l.b16 %v358
        %v487 = vunpack.c.l.b16 %v359
        %v488 = vunpack.c.l.b16 %v360
        %v489 = vunpack.c.l.b16 %v361
        %v490 = vunpack.c.l.b16 %v362
        %v491 = vunpack.c.l.b16 %v363
        %v492 = vunpack.c.l.b16 %v364
        %v493 = vunpack.c.l.b16 %v365
        %v494 = vunpack.c.l.b16 %v366
        %v495 = vunpack.c.l.b16 %v367
        %v496 = vunpack.c.l.b16 %v368
        %v497 = vunpack.c.l.b16 %v369
        %v498 = vunpack.c.l.b16 %v370
        %v499 = vunpack.c.l.b16 %v371
        %v500 = vunpack.c.l.b16 %v372
        %v501 = vpack.c.b16 %v486, %v485
        %v502 = vpack.c.b16 %v488, %v487
        %v503 = vpack.c.b16 %v490, %v489
        %v504 = vpack.c.b16 %v492, %v491
        %v505 = vpack.c.b16 %v494, %v493
        %v506 = vpack.c.b16 %v496, %v495
        %v507 = vpack.c.b16 %v498, %v497
        %v508 = vpack.c.b16 %v500, %v499
        %517 = vmatpush.bf16.msra.mxu0 %v508
        %518 = vmatpush.bf16.msra.mxu0 %v507
        %519 = vmatpush.bf16.msra.mxu0 %v506
        %520 = vmatpush.bf16.msra.mxu0 %v505
        %521 = vmatpush.bf16.msra.mxu0 %v504
        %522 = vmatpush.bf16.msra.mxu0 %v503
        %523 = vmatpush.bf16.msra.mxu0 %v502
        %524 = vmatpush.bf16.msra.mxu0 %v501
        %525 = vmatmul.bf16.gmra.mxu0 %v437
        %v526 = vpop.f32.mrf.mxu0
        %v527 = vadd.f32 0.0, %v526
        %v528 = vpop.f32.mrf.mxu0
        %v529 = vadd.f32 0.0, %v528
        %530 = vmatmul.bf16.gmra.mxu0 %v438
        %v531 = vpop.f32.mrf.mxu0
        %v532 = vadd.f32 0.0, %v531
        %v533 = vpop.f32.mrf.mxu0
        %v534 = vadd.f32 0.0, %v533
        %535 = vmatmul.bf16.gmra.mxu0 %v439
        %v536 = vpop.f32.mrf.mxu0
        %v537 = vadd.f32 0.0, %v536
        %v538 = vpop.f32.mrf.mxu0
        %v539 = vadd.f32 0.0, %v538
        %540 = vmatmul.bf16.gmra.mxu0 %v440
        %v541 = vpop.f32.mrf.mxu0
        %v542 = vadd.f32 0.0, %v541
        %v543 = vpop.f32.mrf.mxu0
        %v544 = vadd.f32 0.0, %v543
        %545 = vmatmul.bf16.gmra.mxu0 %v441
        %v546 = vpop.f32.mrf.mxu0
        %v547 = vadd.f32 0.0, %v546
        %v548 = vpop.f32.mrf.mxu0
        %v549 = vadd.f32 0.0, %v548
        %550 = vmatmul.bf16.gmra.mxu0 %v442
        %v551 = vpop.f32.mrf.mxu0
        %v552 = vadd.f32 0.0, %v551
        %v553 = vpop.f32.mrf.mxu0
        %v554 = vadd.f32 0.0, %v553
        %555 = vmatmul.bf16.gmra.mxu0 %v443
        %v556 = vpop.f32.mrf.mxu0
        %v557 = vadd.f32 0.0, %v556
        %v558 = vpop.f32.mrf.mxu0
        %v559 = vadd.f32 0.0, %v558
        %560 = vmatmul.bf16.gmra.mxu0 %v444
        %v561 = vpop.f32.mrf.mxu0
        %v562 = vadd.f32 0.0, %v561
        %v563 = vpop.f32.mrf.mxu0
        %v564 = vadd.f32 0.0, %v563
        %565 = vmatmul.bf16.gmra.mxu0 %v445
        %v566 = vpop.f32.mrf.mxu0
        %v567 = vadd.f32 0.0, %v566
        %v568 = vpop.f32.mrf.mxu0
        %v569 = vadd.f32 0.0, %v568
        %570 = vmatmul.bf16.gmra.mxu0 %v446
        %v571 = vpop.f32.mrf.mxu0
        %v572 = vadd.f32 0.0, %v571
        %v573 = vpop.f32.mrf.mxu0
        %v574 = vadd.f32 0.0, %v573
        %575 = vmatmul.bf16.gmra.mxu0 %v447
        %v576 = vpop.f32.mrf.mxu0
        %v577 = vadd.f32 0.0, %v576
        %v578 = vpop.f32.mrf.mxu0
        %v579 = vadd.f32 0.0, %v578
        %580 = vmatmul.bf16.gmra.mxu0 %v448
        %v581 = vpop.f32.mrf.mxu0
        %v582 = vadd.f32 0.0, %v581
        %v583 = vpop.f32.mrf.mxu0
        %v584 = vadd.f32 0.0, %v583
        %585 = vmatmul.bf16.gmra.mxu0 %v449
        %v586 = vpop.f32.mrf.mxu0
        %v587 = vadd.f32 0.0, %v586
        %v588 = vpop.f32.mrf.mxu0
        %v589 = vadd.f32 0.0, %v588
        %590 = vmatmul.bf16.gmra.mxu0 %v450
        %v591 = vpop.f32.mrf.mxu0
        %v592 = vadd.f32 0.0, %v591
        %v593 = vpop.f32.mrf.mxu0
        %v594 = vadd.f32 0.0, %v593
        %595 = vmatmul.bf16.gmra.mxu0 %v451
        %v596 = vpop.f32.mrf.mxu0
        %v597 = vadd.f32 0.0, %v596
        %v598 = vpop.f32.mrf.mxu0
        %v599 = vadd.f32 0.0, %v598
        %600 = vmatmul.bf16.gmra.mxu0 %v452
        %v601 = vpop.f32.mrf.mxu0
        %v602 = vadd.f32 0.0, %v601
        %v603 = vpop.f32.mrf.mxu0
        %v604 = vadd.f32 0.0, %v603
        %605 = vdwg.mxu0
        %v606 = vadd.f32 %v286, %v527
        %v607 = vadd.f32 %v287, %v529
        %v608 = vadd.f32 %v288, %v532
        %v609 = vadd.f32 %v289, %v534
        %v610 = vadd.f32 %v290, %v537
        %v611 = vadd.f32 %v291, %v539
        %v612 = vadd.f32 %v292, %v542
        %v613 = vadd.f32 %v293, %v544
        %v614 = vadd.f32 %v294, %v547
        %v615 = vadd.f32 %v295, %v549
        %v616 = vadd.f32 %v296, %v552
        %v617 = vadd.f32 %v297, %v554
        %v618 = vadd.f32 %v298, %v557
        %v619 = vadd.f32 %v299, %v559
        %v620 = vadd.f32 %v300, %v562
        %v621 = vadd.f32 %v301, %v564
        %v622 = vadd.f32 %v302, %v567
        %v623 = vadd.f32 %v303, %v569
        %v624 = vadd.f32 %v304, %v572
        %v625 = vadd.f32 %v305, %v574
        %v626 = vadd.f32 %v306, %v577
        %v627 = vadd.f32 %v307, %v579
        %v628 = vadd.f32 %v308, %v582
        %v629 = vadd.f32 %v309, %v584
        %v630 = vadd.f32 %v310, %v587
        %v631 = vadd.f32 %v311, %v589
        %v632 = vadd.f32 %v312, %v592
        %v633 = vadd.f32 %v313, %v594
        %v634 = vadd.f32 %v314, %v597
        %v635 = vadd.f32 %v315, %v599
        %v636 = vadd.f32 %v316, %v602
        %v637 = vadd.f32 %v317, %v604
        %638 = vst [vmem:[#allocation2] sm:$0xff] %v606
        %639 = vst [vmem:[#allocation2 + $0x8] sm:$0xff] %v607
        %640 = vst [vmem:[#allocation2 + $0x10] sm:$0xff] %v608
        %641 = vst [vmem:[#allocation2 + $0x18] sm:$0xff] %v609
        %642 = vst [vmem:[#allocation2 + $0x20] sm:$0xff] %v610
        %643 = vst [vmem:[#allocation2 + $0x28] sm:$0xff] %v611
        %644 = vst [vmem:[#allocation2 + $0x30] sm:$0xff] %v612
        %645 = vst [vmem:[#allocation2 + $0x38] sm:$0xff] %v613
        %646 = vst [vmem:[#allocation2 + $0x40] sm:$0xff] %v614
        %647 = vst [vmem:[#allocation2 + $0x48] sm:$0xff] %v615
        %648 = vst [vmem:[#allocation2 + $0x50] sm:$0xff] %v616
        %649 = vst [vmem:[#allocation2 + $0x58] sm:$0xff] %v617
        %650 = vst [vmem:[#allocation2 + $0x60] sm:$0xff] %v618
        %651 = vst [vmem:[#allocation2 + $0x68] sm:$0xff] %v619
        %652 = vst [vmem:[#allocation2 + $0x70] sm:$0xff] %v620
        %653 = vst [vmem:[#allocation2 + $0x78] sm:$0xff] %v621
        %654 = vst [vmem:[#allocation2 + $0x80] sm:$0xff] %v622
        %655 = vst [vmem:[#allocation2 + $0x88] sm:$0xff] %v623
        %656 = vst [vmem:[#allocation2 + $0x90] sm:$0xff] %v624
        %657 = vst [vmem:[#allocation2 + $0x98] sm:$0xff] %v625
        %658 = vst [vmem:[#allocation2 + $0xa0] sm:$0xff] %v626
        %659 = vst [vmem:[#allocation2 + $0xa8] sm:$0xff] %v627
        %660 = vst [vmem:[#allocation2 + $0xb0] sm:$0xff] %v628
        %661 = vst [vmem:[#allocation2 + $0xb8] sm:$0xff] %v629
        %662 = vst [vmem:[#allocation2 + $0xc0] sm:$0xff] %v630
        %663 = vst [vmem:[#allocation2 + $0xc8] sm:$0xff] %v631
        %664 = vst [vmem:[#allocation2 + $0xd0] sm:$0xff] %v632
        %665 = vst [vmem:[#allocation2 + $0xd8] sm:$0xff] %v633
        %666 = vst [vmem:[#allocation2 + $0xe0] sm:$0xff] %v634
        %667 = vst [vmem:[#allocation2 + $0xe8] sm:$0xff] %v635
        %668 = vst [vmem:[#allocation2 + $0xf0] sm:$0xff] %v636
        %669 = vst [vmem:[#allocation2 + $0xf8] sm:$0xff] %v637
        // Predicated region
        $region45: #{tpu_custom_call.1} parent=31 // pred_check
          %p670 = pneg %p248
        $region46: #{tpu_custom_call.1} parent=31 // pred_check_branch
          %672 = sbr.rel (%p670) target = $region48
        $region47: #{tpu_custom_call.1} parent=31 // pred_region
          %v673 = vld [vmem:[#allocation2] sm:$0xff]
          %v674 = vld [vmem:[#allocation2 + $0x8] sm:$0xff]
          %v675 = vld [vmem:[#allocation2 + $0x10] sm:$0xff]
          %v676 = vld [vmem:[#allocation2 + $0x18] sm:$0xff]
          %v677 = vld [vmem:[#allocation2 + $0x20] sm:$0xff]
          %v678 = vld [vmem:[#allocation2 + $0x28] sm:$0xff]
          %v679 = vld [vmem:[#allocation2 + $0x30] sm:$0xff]
          %v680 = vld [vmem:[#allocation2 + $0x38] sm:$0xff]
          %v681 = vld [vmem:[#allocation2 + $0x40] sm:$0xff]
          %v682 = vld [vmem:[#allocation2 + $0x48] sm:$0xff]
          %v683 = vld [vmem:[#allocation2 + $0x50] sm:$0xff]
          %v684 = vld [vmem:[#allocation2 + $0x58] sm:$0xff]
          %v685 = vld [vmem:[#allocation2 + $0x60] sm:$0xff]
          %v686 = vld [vmem:[#allocation2 + $0x68] sm:$0xff]
          %v687 = vld [vmem:[#allocation2 + $0x70] sm:$0xff]
          %v688 = vld [vmem:[#allocation2 + $0x78] sm:$0xff]
          %v689 = vld [vmem:[#allocation2 + $0x80] sm:$0xff]
          %v690 = vld [vmem:[#allocation2 + $0x88] sm:$0xff]
          %v691 = vld [vmem:[#allocation2 + $0x90] sm:$0xff]
          %v692 = vld [vmem:[#allocation2 + $0x98] sm:$0xff]
          %v693 = vld [vmem:[#allocation2 + $0xa0] sm:$0xff]
          %v694 = vld [vmem:[#allocation2 + $0xa8] sm:$0xff]
          %v695 = vld [vmem:[#allocation2 + $0xb0] sm:$0xff]
          %v696 = vld [vmem:[#allocation2 + $0xb8] sm:$0xff]
          %v697 = vld [vmem:[#allocation2 + $0xc0] sm:$0xff]
          %v698 = vld [vmem:[#allocation2 + $0xc8] sm:$0xff]
          %v699 = vld [vmem:[#allocation2 + $0xd0] sm:$0xff]
          %v700 = vld [vmem:[#allocation2 + $0xd8] sm:$0xff]
          %v701 = vld [vmem:[#allocation2 + $0xe0] sm:$0xff]
          %v702 = vld [vmem:[#allocation2 + $0xe8] sm:$0xff]
          %v703 = vld [vmem:[#allocation2 + $0xf0] sm:$0xff]
          %v704 = vld [vmem:[#allocation2 + $0xf8] sm:$0xff]
          %v705 = vld [vmem:[%s246] sm:$0x1]
          %v707 = vperm.slane %v705, 0
          %v709 = vadd.f32 %v673, %v707
          %v710 = vadd.f32 %v674, %v707
          %v711 = vadd.f32 %v675, %v707
          %v712 = vadd.f32 %v676, %v707
          %v713 = vadd.f32 %v677, %v707
          %v714 = vadd.f32 %v678, %v707
          %v715 = vadd.f32 %v679, %v707
          %v716 = vadd.f32 %v680, %v707
          %v717 = vadd.f32 %v681, %v707
          %v718 = vadd.f32 %v682, %v707
          %v719 = vadd.f32 %v683, %v707
          %v720 = vadd.f32 %v684, %v707
          %v721 = vadd.f32 %v685, %v707
          %v722 = vadd.f32 %v686, %v707
          %v723 = vadd.f32 %v687, %v707
          %v724 = vadd.f32 %v688, %v707
          %v725 = vadd.f32 %v689, %v707
          %v726 = vadd.f32 %v690, %v707
          %v727 = vadd.f32 %v691, %v707
          %v728 = vadd.f32 %v692, %v707
          %v729 = vadd.f32 %v693, %v707
          %v730 = vadd.f32 %v694, %v707
          %v731 = vadd.f32 %v695, %v707
          %v732 = vadd.f32 %v696, %v707
          %v733 = vadd.f32 %v697, %v707
          %v734 = vadd.f32 %v698, %v707
          %v735 = vadd.f32 %v699, %v707
          %v736 = vadd.f32 %v700, %v707
          %v737 = vadd.f32 %v701, %v707
          %v738 = vadd.f32 %v702, %v707
          %v739 = vadd.f32 %v703, %v707
          %v740 = vadd.f32 %v704, %v707
          %v741 = vmax.f32 %v709, 0.0
          %v742 = vmax.f32 %v710, 0.0
          %v743 = vmax.f32 %v711, 0.0
          %v744 = vmax.f32 %v712, 0.0
          %v745 = vmax.f32 %v713, 0.0
          %v746 = vmax.f32 %v714, 0.0
          %v747 = vmax.f32 %v715, 0.0
          %v748 = vmax.f32 %v716, 0.0
          %v749 = vmax.f32 %v717, 0.0
          %v750 = vmax.f32 %v718, 0.0
          %v751 = vmax.f32 %v719, 0.0
          %v752 = vmax.f32 %v720, 0.0
          %v753 = vmax.f32 %v721, 0.0
          %v754 = vmax.f32 %v722, 0.0
          %v755 = vmax.f32 %v723, 0.0
          %v756 = vmax.f32 %v724, 0.0
          %v757 = vmax.f32 %v725, 0.0
          %v758 = vmax.f32 %v726, 0.0
          %v759 = vmax.f32 %v727, 0.0
          %v760 = vmax.f32 %v728, 0.0
          %v761 = vmax.f32 %v729, 0.0
          %v762 = vmax.f32 %v730, 0.0
          %v763 = vmax.f32 %v731, 0.0
          %v764 = vmax.f32 %v732, 0.0
          %v765 = vmax.f32 %v733, 0.0
          %v766 = vmax.f32 %v734, 0.0
          %v767 = vmax.f32 %v735, 0.0
          %v768 = vmax.f32 %v736, 0.0
          %v769 = vmax.f32 %v737, 0.0
          %v770 = vmax.f32 %v738, 0.0
          %v771 = vmax.f32 %v739, 0.0
          %v772 = vmax.f32 %v740, 0.0
          %v773 = vpack.c.bf16 %v741, %v741
          %v774 = vpack.c.bf16 %v742, %v742
          %v775 = vpack.c.bf16 %v743, %v743
          %v776 = vpack.c.bf16 %v744, %v744
          %v777 = vpack.c.bf16 %v745, %v745
          %v778 = vpack.c.bf16 %v746, %v746
          %v779 = vpack.c.bf16 %v747, %v747
          %v780 = vpack.c.bf16 %v748, %v748
          %v781 = vpack.c.bf16 %v749, %v749
          %v782 = vpack.c.bf16 %v750, %v750
          %v783 = vpack.c.bf16 %v751, %v751
          %v784 = vpack.c.bf16 %v752, %v752
          %v785 = vpack.c.bf16 %v753, %v753
          %v786 = vpack.c.bf16 %v754, %v754
          %v787 = vpack.c.bf16 %v755, %v755
          %v788 = vpack.c.bf16 %v756, %v756
          %v789 = vpack.c.bf16 %v757, %v757
          %v790 = vpack.c.bf16 %v758, %v758
          %v791 = vpack.c.bf16 %v759, %v759
          %v792 = vpack.c.bf16 %v760, %v760
          %v793 = vpack.c.bf16 %v761, %v761
          %v794 = vpack.c.bf16 %v762, %v762
          %v795 = vpack.c.bf16 %v763, %v763
          %v796 = vpack.c.bf16 %v764, %v764
          %v797 = vpack.c.bf16 %v765, %v765
          %v798 = vpack.c.bf16 %v766, %v766
          %v799 = vpack.c.bf16 %v767, %v767
          %v800 = vpack.c.bf16 %v768, %v768
          %v801 = vpack.c.bf16 %v769, %v769
          %v802 = vpack.c.bf16 %v770, %v770
          %v803 = vpack.c.bf16 %v771, %v771
          %v804 = vpack.c.bf16 %v772, %v772
          %805 = vst [vmem:[%s242] sm:$0xf] %v773
          %806 = vst [vmem:[%s242 + $0x4] sm:$0xf] %v774
          %807 = vst [vmem:[%s242 + $0x8] sm:$0xf] %v775
          %808 = vst [vmem:[%s242 + $0xc] sm:$0xf] %v776
          %809 = vst [vmem:[%s242 + $0x10] sm:$0xf] %v777
          %810 = vst [vmem:[%s242 + $0x14] sm:$0xf] %v778
          %811 = vst [vmem:[%s242 + $0x18] sm:$0xf] %v779
          %812 = vst [vmem:[%s242 + $0x1c] sm:$0xf] %v780
          %813 = vst [vmem:[%s242 + $0x20] sm:$0xf] %v781
          %814 = vst [vmem:[%s242 + $0x24] sm:$0xf] %v782
          %815 = vst [vmem:[%s242 + $0x28] sm:$0xf] %v783
          %816 = vst [vmem:[%s242 + $0x2c] sm:$0xf] %v784
          %817 = vst [vmem:[%s242 + $0x30] sm:$0xf] %v785
          %818 = vst [vmem:[%s242 + $0x34] sm:$0xf] %v786
          %819 = vst [vmem:[%s242 + $0x38] sm:$0xf] %v787
          %820 = vst [vmem:[%s242 + $0x3c] sm:$0xf] %v788
          %821 = vst [vmem:[%s242 + $0x40] sm:$0xf] %v789
          %822 = vst [vmem:[%s242 + $0x44] sm:$0xf] %v790
          %823 = vst [vmem:[%s242 + $0x48] sm:$0xf] %v791
          %824 = vst [vmem:[%s242 + $0x4c] sm:$0xf] %v792
          %825 = vst [vmem:[%s242 + $0x50] sm:$0xf] %v793
          %826 = vst [vmem:[%s242 + $0x54] sm:$0xf] %v794
          %827 = vst [vmem:[%s242 + $0x58] sm:$0xf] %v795
          %828 = vst [vmem:[%s242 + $0x5c] sm:$0xf] %v796
          %829 = vst [vmem:[%s242 + $0x60] sm:$0xf] %v797
          %830 = vst [vmem:[%s242 + $0x64] sm:$0xf] %v798
          %831 = vst [vmem:[%s242 + $0x68] sm:$0xf] %v799
          %832 = vst [vmem:[%s242 + $0x6c] sm:$0xf] %v800
          %833 = vst [vmem:[%s242 + $0x70] sm:$0xf] %v801
          %834 = vst [vmem:[%s242 + $0x74] sm:$0xf] %v802
          %835 = vst [vmem:[%s242 + $0x78] sm:$0xf] %v803
          %836 = vst [vmem:[%s242 + $0x7c] sm:$0xf] %v804
        $region48: #{tpu_custom_call.1} parent=31 // pred_fallthru
          _
        %s837 = sand.u32 %s125, 1
        %s838 = scalar_lea.sflag [#allocation5], %s837
        %s839 = sand.u32 %s125, 1
        %s840 = smul.addr %s839, 128
        %s841 = scalar_lea.vmem [#allocation8], %s840
        // Predicated region
        $region49: #{tpu_custom_call.1} parent=31 // pred_check
          %p842 = pneg %p135
        $region50: #{tpu_custom_call.1} parent=31 // pred_check_branch
          %844 = sbr.rel (%p842) target = $region52
        $region51: #{tpu_custom_call.1} parent=31 // pred_region
          %s845 = smul.u32 32, %s26
          %847 = vsyncadd %s838, 0
          %s848 = sadd.s32 %s27, %s845
          %s849 = smul.addr %s848, 4
          %s850 = scalar_lea.hbm %s3, %s849
          %s851 = sshll.u32 %s841, 4
          %s852 = int_to_ptr.vmem [resolvable:$true] %s851
          %s853 = sshll.u32 %s850, 4
          %s854 = int_to_ptr.hbm [resolvable:$true] %s853
          %859 = dma.vmem_to_hbm [thread:$0]  %s852, 2048, %s854, %s838, 64, 64, 4
        $region52: #{tpu_custom_call.1} parent=31 // pred_fallthru
          _
      $region32: #{tpu_custom_call.1} parent=5 // pred_fallthru
        _
      %p860 = scmp.le.s32.totalorder 2, %s16
      // Predicated region
      $region53: #{tpu_custom_call.1} parent=5 // pred_check
        %p861 = pneg %p860
      $region54: #{tpu_custom_call.1} parent=5 // pred_check_branch
        %863 = sbr.rel (%p861) target = $region56
      $region55: #{tpu_custom_call.1} parent=5 // pred_region
        %s864 = ssub.s32 %s16, 2
        // Predicated region
        $region57: #{tpu_custom_call.1} parent=55 // pred_check
          %p865 = pneg %p141
        $region58: #{tpu_custom_call.1} parent=55 // pred_check_branch
          %867 = sbr.rel (%p865) target = $region60
        $region59: #{tpu_custom_call.1} parent=55 // pred_region
          %s868 = sand.u32 %s126, 1
          %s869 = scalar_lea.sflag [#allocation5], %s868
          %s870 = sand.u32 %s126, 1
          %s871 = smul.addr %s870, 128
          %s872 = scalar_lea.vmem [#allocation8], %s871
          %874 = dma.done %s869, 2048
        $region60: #{tpu_custom_call.1} parent=55 // pred_fallthru
          _
      $region56: #{tpu_custom_call.1} parent=5 // pred_fallthru
        _
    $region6: #{tpu_custom_call.1} parent=1 // loop_footer
      %s20 = sadd.s32 1, %s16
    $region7: #{tpu_custom_call.1} parent=1 // loop_footer_branch
      %15 = sbr.rel target = $region3
    $region8: #{tpu_custom_call.1} parent=1 // loop_exit
      _
    %875 = vsyncpa [#allocation4], 1
    %s876 = scalar_lea.sflag [#allocation4], 1
    %877 = vsyncpa %s876, 1
    %878 = vsyncpa [#allocation7], 1
    %879 = vsyncpa [#allocation5], 1
    %s880 = scalar_lea.sflag [#allocation5], 1
    %881 = vsyncpa %s880, 1

</llo_original>
